<compile_context>
chip_gen: v5e
topology: v5e:2x2
jax: 0.10.0
libtpu: 0.0.40
codegen_flags: <defaults>
</compile_context>

<pallas_src>
import functools

import jax
import jax.numpy as jnp
from jax.experimental import pallas as pl
from jax.experimental.pallas import tpu as pltpu

LEAKY_CF = 0.2
BN_EPS = 1e-5
LANES = 128


def _leaky_relu(x, cf):
    return jnp.where(x > 0, x, cf * x)


def _round_up(n, m):
    return (n + m - 1) // m * m


def bi_gan_encoder_kernel(x_ref, w1_ref, b1_ref, w2_ref, b2_ref, w3_ref, b3_ref,
                          o_ref):
    """Whole MLP in one invocation (small shapes, everything resident in VMEM)."""
    # Read x in its native dtype; cast only the MXU operand to bf16.
    x = x_ref[...]                                            # (B, input_dim)
    xb = x.astype(jnp.bfloat16)

    # Linear 1 (K = input_dim) + LeakyReLU.  bf16 MXU inputs, f32 accumulate,
    # f32 epilogue.
    h = jnp.dot(xb, w1_ref[...], preferred_element_type=jnp.float32) + b1_ref[...]
    h = _leaky_relu(h, LEAKY_CF)

    # Linear 2.
    h = jnp.dot(h.astype(jnp.bfloat16), w2_ref[...],
                preferred_element_type=jnp.float32) + b2_ref[...]

    # BatchNorm1d(affine=False), training-mode biased batch statistics, in f32.
    # Zero-padded hidden columns stay exactly zero: (0 - 0) * rsqrt(eps) = 0.
    mean = jnp.mean(h, axis=0, keepdims=True)                 # (1, hidden_pad)
    var = jnp.mean((h - mean) * (h - mean), axis=0, keepdims=True)
    h = (h - mean) * jax.lax.rsqrt(var + BN_EPS)              # rsqrt -> EUP slot

    # LeakyReLU.
    h = _leaky_relu(h, LEAKY_CF)

    # Linear 3 (output projection); lane-dense padded store.
    out = jnp.dot(h.astype(jnp.bfloat16), w3_ref[...],
                  preferred_element_type=jnp.float32) + b3_ref[...]
    o_ref[...] = out.astype(o_ref.dtype)


def prepare_params(w1, b1, w2, b2, w3, b3, *, weight_dtype=jnp.bfloat16):
    """One-time (model-load time) prep, kept out of the jitted hot path:
    zero-pad every lane dimension up to a multiple of 128 and cast the matmul
    weights to bf16.  Padded rows/cols are zero, so results are unchanged."""
    def pad2(a, rows, cols):
        return jnp.pad(a, ((0, rows - a.shape[0]), (0, cols - a.shape[1])))

    in_dim, hidden = w1.shape
    out_dim = w3.shape[1]
    hid_p = _round_up(hidden, LANES)
    out_p = _round_up(out_dim, LANES)

    w1p = pad2(w1, in_dim, hid_p).astype(weight_dtype)
    w2p = pad2(w2, hid_p, hid_p).astype(weight_dtype)
    w3p = pad2(w3, hid_p, out_p).astype(weight_dtype)
    b1p = pad2(b1, 1, hid_p).astype(jnp.float32)
    b2p = pad2(b2, 1, hid_p).astype(jnp.float32)
    b3p = pad2(b3, 1, out_p).astype(jnp.float32)
    return w1p, b1p, w2p, b2p, w3p, b3p


@functools.partial(jax.jit, static_argnames=("output_dim",))
def bi_gan_encoder(x, w1p, b1p, w2p, b2p, w3p, b3p, *, output_dim):
    batch = x.shape[0]
    x_flat = x.reshape(batch, -1)        # reshape only — the dtype cast lives in-kernel
    out_p = w3p.shape[1]

    # Everything (x, padded bf16 weights, activations) is tiny at these sizes;
    # stay monolithic, but set an explicit scoped-VMEM limit derived from the
    # actual footprint so the same code keeps compiling on v7x's smaller VMEM.
    est_bytes = (
        x_flat.size * x_flat.dtype.itemsize
        + sum(a.size * a.dtype.itemsize for a in (w1p, b1p, w2p, b2p, w3p, b3p))
        + batch * out_p * 4)
    vmem_limit = int(min(max(4 * est_bytes, 8 * 1024 * 1024), 48 * 1024 * 1024))

    vmem = pl.BlockSpec(memory_space=pltpu.MemorySpace.VMEM)
    out_padded = pl.pallas_call(
        bi_gan_encoder_kernel,
        out_shape=jax.ShapeDtypeStruct((batch, out_p), jnp.float32),
        in_specs=[vmem] * 7,
        out_specs=vmem,
        compiler_params=pltpu.CompilerParams(vmem_limit_bytes=vmem_limit),
    )(x_flat, w1p, b1p, w2p, b2p, w3p, b3p)
    return out_padded[:, :output_dim]


def init_params(key, input_dim, hidden_dim, output_dim):
    """Deterministic PyTorch-style uniform init; weights stored as (in, out)."""
    ks = jax.random.split(key, 6)

    def lin(kw, kb, fan_in, fan_out):
        bound = 1.0 / jnp.sqrt(jnp.float32(fan_in))
        w = jax.random.uniform(kw, (fan_in, fan_out), jnp.float32, -bound, bound)
        b = jax.random.uniform(kb, (1, fan_out), jnp.float32, -bound, bound)
        return w, b

    w1, b1 = lin(ks[0], ks[1], input_dim, hidden_dim)
    w2, b2 = lin(ks[2], ks[3], hidden_dim, hidden_dim)
    w3, b3 = lin(ks[4], ks[5], hidden_dim, output_dim)
    return w1, b1, w2, b2, w3, b3


def reference_f32(x, w1, b1, w2, b2, w3, b3):
    """Pure-f32 JAX mirror of the PyTorch forward (training-mode BN)."""
    h = x.reshape(x.shape[0], -1).astype(jnp.float32)
    h = h @ w1 + b1
    h = jnp.where(h > 0, h, LEAKY_CF * h)
    h = h @ w2 + b2
    mean = jnp.mean(h, axis=0, keepdims=True)
    var = jnp.mean((h - mean) ** 2, axis=0, keepdims=True)
    h = (h - mean) / jnp.sqrt(var + BN_EPS)
    h = jnp.where(h > 0, h, LEAKY_CF * h)
    return h @ w3 + b3


def reference_bf16_matmul(x, w1, b1, w2, b2, w3, b3):
    """Same numerics as the kernel: bf16 matmul operands, f32 accumulation and
    f32 bias / BatchNorm / LeakyReLU.  Used for the tight correctness check."""
    def mm(a, w):
        return jnp.dot(a.astype(jnp.bfloat16), w.astype(jnp.bfloat16),
                       preferred_element_type=jnp.float32)

    h = x.reshape(x.shape[0], -1)
    h = mm(h, w1) + b1
    h = jnp.where(h > 0, h, LEAKY_CF * h)
    h = mm(h, w2) + b2
    mean = jnp.mean(h, axis=0, keepdims=True)
    var = jnp.mean((h - mean) ** 2, axis=0, keepdims=True)
    h = (h - mean) * jax.lax.rsqrt(var + BN_EPS)
    h = jnp.where(h > 0, h, LEAKY_CF * h)
    return mm(h, w3) + b3


if __name__ == "__main__":
    # Small shapes consistent with the module: NCHW input [2, 4, 16, 16]
    # -> input_dim = 4*16*16 = 1024, hidden_dim = 32, output_dim = 8.
    batch, c, h_sp, w_sp = 2, 4, 16, 16
    input_dim = c * h_sp * w_sp
    hidden_dim = 32
    output_dim = 8

    key = jax.random.PRNGKey(0)
    k_x, k_p = jax.random.split(key)
    x = jax.random.normal(k_x, (batch, c, h_sp, w_sp), jnp.float32)
    params = init_params(k_p, input_dim, hidden_dim, output_dim)
    prepped = prepare_params(*params)

    out = bi_gan_encoder(x, *prepped, output_dim=output_dim)
    out = jax.block_until_ready(out)
    assert out.shape == (batch, output_dim), out.shape

    # Tight check against a pure-JAX mirror of the kernel's exact numerics
    # (bf16 matmul operands, f32 everything else).
    ref_matched = reference_bf16_matmul(x, *params)
    err_matched = float(jnp.max(jnp.abs(out - ref_matched)))
    assert jnp.allclose(out, ref_matched, atol=2e-3, rtol=2e-3), err_matched

    # Loose sanity check against the full-f32 module-equivalent forward.
    # bf16 matmul rounding can be amplified by batch-2 BatchNorm on hidden
    # units whose batch variance is ~0, hence the wide tolerance here.
    ref_f32 = reference_f32(x, *params)
    err_f32 = float(jnp.max(jnp.abs(out - ref_f32)))
    assert jnp.allclose(out, ref_f32, atol=0.5), err_f32

    print("KERNEL_OK")
</pallas_src>

<mosaic_0001>
module attributes {stable_mosaic.version = 11 : i64} {
  func.func @bi_gan_encoder_kernel(%arg0: memref<2x1024xf32, #tpu.memory_space<vmem>>, %arg1: memref<1024x128xbf16, #tpu.memory_space<vmem>>, %arg2: memref<1x128xf32, #tpu.memory_space<vmem>>, %arg3: memref<128x128xbf16, #tpu.memory_space<vmem>>, %arg4: memref<1x128xf32, #tpu.memory_space<vmem>>, %arg5: memref<128x128xbf16, #tpu.memory_space<vmem>>, %arg6: memref<1x128xf32, #tpu.memory_space<vmem>>, %arg7: memref<2x128xf32, #tpu.memory_space<vmem>>) attributes {dimension_semantics = [], scalar_prefetch = 0 : i64, scratch_operands = 0 : i64, tpu.core_type = #tpu.core_type<tc>} {
    %c0 = arith.constant 0 : index
    %c0_0 = arith.constant 0 : index
    %0 = vector.load %arg0[%c0, %c0_0] : memref<2x1024xf32, #tpu.memory_space<vmem>>, vector<2x1024xf32>
    %1 = arith.truncf %0 : vector<2x1024xf32> to vector<2x1024xbf16>
    %c0_1 = arith.constant 0 : index
    %c0_2 = arith.constant 0 : index
    %2 = vector.load %arg1[%c0_1, %c0_2] : memref<1024x128xbf16, #tpu.memory_space<vmem>>, vector<1024x128xbf16>
    %cst = arith.constant dense<0.000000e+00> : vector<2x128xf32>
    %3 = tpu.matmul %1, %2, %cst {dimension_numbers = #tpu.dot_dimension_numbers<[1], [0], [0], [1], [0, 0, 1, 1], [], []>} : vector<2x1024xbf16>, vector<1024x128xbf16>, vector<2x128xf32> -> vector<2x128xf32>
    %c0_3 = arith.constant 0 : index
    %c0_4 = arith.constant 0 : index
    %4 = vector.load %arg2[%c0_3, %c0_4] : memref<1x128xf32, #tpu.memory_space<vmem>>, vector<1x128xf32>
    %5 = vector.broadcast %4 : vector<1x128xf32> to vector<2x128xf32>
    %6 = arith.addf %3, %5 : vector<2x128xf32>
    %cst_5 = arith.constant 0.000000e+00 : f32
    %7 = vector.broadcast %cst_5 : f32 to vector<2x128xf32>
    %8 = arith.cmpf ogt, %6, %7 : vector<2x128xf32>
    %cst_6 = arith.constant 2.000000e-01 : f32
    %9 = vector.broadcast %cst_6 : f32 to vector<2x128xf32>
    %10 = arith.mulf %9, %6 : vector<2x128xf32>
    %11 = arith.select %8, %6, %10 : vector<2x128xi1>, vector<2x128xf32>
    %12 = arith.truncf %11 : vector<2x128xf32> to vector<2x128xbf16>
    %c0_7 = arith.constant 0 : index
    %c0_8 = arith.constant 0 : index
    %13 = vector.load %arg3[%c0_7, %c0_8] : memref<128x128xbf16, #tpu.memory_space<vmem>>, vector<128x128xbf16>
    %cst_9 = arith.constant dense<0.000000e+00> : vector<2x128xf32>
    %14 = tpu.matmul %12, %13, %cst_9 {dimension_numbers = #tpu.dot_dimension_numbers<[1], [0], [0], [1], [0, 0, 1, 1], [], []>} : vector<2x128xbf16>, vector<128x128xbf16>, vector<2x128xf32> -> vector<2x128xf32>
    %c0_10 = arith.constant 0 : index
    %c0_11 = arith.constant 0 : index
    %15 = vector.load %arg4[%c0_10, %c0_11] : memref<1x128xf32, #tpu.memory_space<vmem>>, vector<1x128xf32>
    %16 = vector.broadcast %15 : vector<1x128xf32> to vector<2x128xf32>
    %17 = arith.addf %14, %16 : vector<2x128xf32>
    %cst_12 = arith.constant dense<0.000000e+00> : vector<128xf32>
    %18 = vector.multi_reduction <add>, %17, %cst_12 [0] : vector<2x128xf32> to vector<128xf32>
    %19 = vector.shape_cast %18 : vector<128xf32> to vector<1x128xf32>
    %cst_13 = arith.constant 2.000000e+00 : f32
    %20 = vector.broadcast %cst_13 : f32 to vector<1x128xf32>
    %21 = arith.divf %19, %20 : vector<1x128xf32>
    %22 = vector.broadcast %21 : vector<1x128xf32> to vector<2x128xf32>
    %23 = arith.subf %17, %22 : vector<2x128xf32>
    %24 = vector.broadcast %21 : vector<1x128xf32> to vector<2x128xf32>
    %25 = arith.subf %17, %24 : vector<2x128xf32>
    %26 = arith.mulf %23, %25 : vector<2x128xf32>
    %cst_14 = arith.constant dense<0.000000e+00> : vector<128xf32>
    %27 = vector.multi_reduction <add>, %26, %cst_14 [0] : vector<2x128xf32> to vector<128xf32>
    %28 = vector.shape_cast %27 : vector<128xf32> to vector<1x128xf32>
    %cst_15 = arith.constant 2.000000e+00 : f32
    %29 = vector.broadcast %cst_15 : f32 to vector<1x128xf32>
    %30 = arith.divf %28, %29 : vector<1x128xf32>
    %31 = vector.broadcast %21 : vector<1x128xf32> to vector<2x128xf32>
    %32 = arith.subf %17, %31 : vector<2x128xf32>
    %cst_16 = arith.constant 9.99999974E-6 : f32
    %33 = vector.broadcast %cst_16 : f32 to vector<1x128xf32>
    %34 = arith.addf %30, %33 : vector<1x128xf32>
    %35 = math.rsqrt %34 : vector<1x128xf32>
    %36 = vector.broadcast %35 : vector<1x128xf32> to vector<2x128xf32>
    %37 = arith.mulf %32, %36 : vector<2x128xf32>
    %cst_17 = arith.constant 0.000000e+00 : f32
    %38 = vector.broadcast %cst_17 : f32 to vector<2x128xf32>
    %39 = arith.cmpf ogt, %37, %38 : vector<2x128xf32>
    %cst_18 = arith.constant 2.000000e-01 : f32
    %40 = vector.broadcast %cst_18 : f32 to vector<2x128xf32>
    %41 = arith.mulf %40, %37 : vector<2x128xf32>
    %42 = arith.select %39, %37, %41 : vector<2x128xi1>, vector<2x128xf32>
    %43 = arith.truncf %42 : vector<2x128xf32> to vector<2x128xbf16>
    %c0_19 = arith.constant 0 : index
    %c0_20 = arith.constant 0 : index
    %44 = vector.load %arg5[%c0_19, %c0_20] : memref<128x128xbf16, #tpu.memory_space<vmem>>, vector<128x128xbf16>
    %cst_21 = arith.constant dense<0.000000e+00> : vector<2x128xf32>
    %45 = tpu.matmul %43, %44, %cst_21 {dimension_numbers = #tpu.dot_dimension_numbers<[1], [0], [0], [1], [0, 0, 1, 1], [], []>} : vector<2x128xbf16>, vector<128x128xbf16>, vector<2x128xf32> -> vector<2x128xf32>
    %c0_22 = arith.constant 0 : index
    %c0_23 = arith.constant 0 : index
    %46 = vector.load %arg6[%c0_22, %c0_23] : memref<1x128xf32, #tpu.memory_space<vmem>>, vector<1x128xf32>
    %47 = vector.broadcast %46 : vector<1x128xf32> to vector<2x128xf32>
    %48 = arith.addf %45, %47 : vector<2x128xf32>
    %c0_24 = arith.constant 0 : index
    %c0_25 = arith.constant 0 : index
    %49 = vector.load %arg7[%c0_24, %c0_25] : memref<2x128xf32, #tpu.memory_space<vmem>>, vector<2x128xf32>
    tpu.vector_store %arg7[%c0_24, %c0_25], %48 {strides = array<i32>} : memref<2x128xf32, #tpu.memory_space<vmem>>, vector<2x128xf32>,
    return
  }
}

</mosaic_0001>

<llo_original>
// kernel: bi_gan_encoder.1
$region0: #{bi_gan_encoder.1}
  #allocation0 [shape = 'u32[]', space=smem, size = 0x4, offset = 0x4, fixed_abs, tag = 'smem constant byte address 0x4 - core index']
  #allocation1 [shape = 'u32[72,128]{1,0:T(1,128)}', space=vmem, size = 0x9000, scoped, tag = 'internal scratch']
  %s0 = inlined_call_operand.vmem [shape: f32[2,1024], index: 0, kind: input, shape index: {}]
  %s1 = inlined_call_operand.hbm [shape: bf16[1024,128], index: 1, kind: input, shape index: {}]
  %s2 = inlined_call_operand.vmem [shape: f32[1,128], index: 2, kind: input, shape index: {}]
  %s3 = inlined_call_operand.vmem [shape: bf16[128,128], index: 3, kind: input, shape index: {}]
  %s4 = inlined_call_operand.vmem [shape: f32[1,128], index: 4, kind: input, shape index: {}]
  %s5 = inlined_call_operand.vmem [shape: bf16[128,128], index: 5, kind: input, shape index: {}]
  %s6 = inlined_call_operand.vmem [shape: f32[1,128], index: 6, kind: input, shape index: {}]
  %s7 = inlined_call_operand.hbm [shape: f32[2,128], index: 7, kind: output, shape index: {}]
  %s8 = sld [smem:[#allocation0]]
  $region42: #{bi_gan_encoder.1} parent=0
    _
  %s10 = ssub.s32 1, %s8
  %s11 = scalar_select 0, %s10, %s8
  $region1: #{bi_gan_encoder.1} parent=0
    #allocation2 [shape = 'u8[262144]{0}', space=vmem, size = 0x40000, scoped, tag = 'input window, operand 1, single buffered']
    #allocation3 [shape = 's32[1]{0}', space=sflag, size = 0x4, scoped, tag = 'scoped memory for bi_gan_encoder.1']
    #allocation4 [shape = 's32[1]{0}', space=sflag, size = 0x4, scoped, tag = 'scoped memory for bi_gan_encoder.1']
    #allocation5 [shape = 'u8[1024]{0}', space=vmem, size = 0x400, scoped, tag = 'output window, operand 0, single buffered']
    %12 = vsyncpa [#allocation3], 0
    %13 = vsyncpa [#allocation4], 0
    // Predicated region
    $region2: #{bi_gan_encoder.1} parent=1 // pred_check
      _
    $region3: #{bi_gan_encoder.1} parent=1 // pred_check_branch
      %15 = sbr.rel (0) target = $region5
    $region4: #{bi_gan_encoder.1} parent=1 // pred_region
      _
    $region5: #{bi_gan_encoder.1} parent=1 // pred_fallthru
      _
    // Predicated region
    $region6: #{bi_gan_encoder.1} parent=1 // pred_check
      _
    $region7: #{bi_gan_encoder.1} parent=1 // pred_check_branch
      %17 = sbr.rel (0) target = $region9
    $region8: #{bi_gan_encoder.1} parent=1 // pred_region
      %19 = vsyncadd [#allocation3], 0
      %s20 = sshll.u32 %s1, 4
      %s21 = int_to_ptr.hbm [resolvable:$true] %s20
      %s22 = sshll.u32 [#allocation2], 4
      %s23 = int_to_ptr.vmem [resolvable:$true] %s22
      %28 = dma.hbm_to_vmem [thread:$0]  %s21, 8192, %s23, [#allocation3], 64, 64, 4
    $region9: #{bi_gan_encoder.1} parent=1 // pred_fallthru
      _
    // Predicated region
    $region10: #{bi_gan_encoder.1} parent=1 // pred_check
      _
    $region11: #{bi_gan_encoder.1} parent=1 // pred_check_branch
      %30 = sbr.rel (0) target = $region13
    $region12: #{bi_gan_encoder.1} parent=1 // pred_region
      _
    $region13: #{bi_gan_encoder.1} parent=1 // pred_fallthru
      _
    // Predicated region
    $region14: #{bi_gan_encoder.1} parent=1 // pred_check
      _
    $region15: #{bi_gan_encoder.1} parent=1 // pred_check_branch
      %32 = sbr.rel (0) target = $region17
    $region16: #{bi_gan_encoder.1} parent=1 // pred_region
      _
    $region17: #{bi_gan_encoder.1} parent=1 // pred_fallthru
      _
    // Predicated region
    $region18: #{bi_gan_encoder.1} parent=1 // pred_check
      _
    $region19: #{bi_gan_encoder.1} parent=1 // pred_check_branch
      %34 = sbr.rel (0) target = $region21
    $region20: #{bi_gan_encoder.1} parent=1 // pred_region
      _
    $region21: #{bi_gan_encoder.1} parent=1 // pred_fallthru
      _
    // Predicated region
    $region22: #{bi_gan_encoder.1} parent=1 // pred_check
      _
    $region23: #{bi_gan_encoder.1} parent=1 // pred_check_branch
      %36 = sbr.rel (0) target = $region25
    $region24: #{bi_gan_encoder.1} parent=1 // pred_region
      _
    $region25: #{bi_gan_encoder.1} parent=1 // pred_fallthru
      _
    // Predicated region
    $region26: #{bi_gan_encoder.1} parent=1 // pred_check
      _
    $region27: #{bi_gan_encoder.1} parent=1 // pred_check_branch
      %38 = sbr.rel (0) target = $region29
    $region28: #{bi_gan_encoder.1} parent=1 // pred_region
      _
    $region29: #{bi_gan_encoder.1} parent=1 // pred_fallthru
      _
    // Predicated region
    $region30: #{bi_gan_encoder.1} parent=1 // pred_check
      _
    $region31: #{bi_gan_encoder.1} parent=1 // pred_check_branch
      %40 = sbr.rel (0) target = $region33
    $region32: #{bi_gan_encoder.1} parent=1 // pred_region
      %42 = dma.done [#allocation3], 8192
    $region33: #{bi_gan_encoder.1} parent=1 // pred_fallthru
      _
    %v43 = vld [vmem:[%s0] sm:$0xff]
    %v44 = vld [vmem:[%s0 + $0x8] sm:$0xff]
    %47 = vst [vmem:[#allocation1] ss:$4 sm:$0xff] %v43
    %s48 = scalar_lea.vmem [#allocation1], 32
    %49 = vst [vmem:[%s48] ss:$4 sm:$0xff] %v44
    %v50 = vld.sshfl [vmem:[#allocation1] sm:$0xff pattern:$0x73625140]
    %v51 = vld.sshfl [vmem:[#allocation1 + $0x8] sm:$0xff pattern:$0x73625140]
    %v52 = vld.sshfl [vmem:[#allocation1 + $0x10] sm:$0xff pattern:$0x73625140]
    %v53 = vld.sshfl [vmem:[#allocation1 + $0x18] sm:$0xff pattern:$0x73625140]
    %v54 = vld.sshfl [vmem:[#allocation1 + $0x20] sm:$0xff pattern:$0x73625140]
    %v55 = vld.sshfl [vmem:[#allocation1 + $0x28] sm:$0xff pattern:$0x73625140]
    %v56 = vld.sshfl [vmem:[#allocation1 + $0x30] sm:$0xff pattern:$0x73625140]
    %v57 = vld.sshfl [vmem:[#allocation1 + $0x38] sm:$0xff pattern:$0x73625140]
    %v66 = vpack.c.bf16 %v50, %v50
    %v67 = vpack.c.bf16 %v51, %v51
    %v68 = vpack.c.bf16 %v52, %v52
    %v69 = vpack.c.bf16 %v53, %v53
    %v70 = vpack.c.bf16 %v54, %v54
    %v71 = vpack.c.bf16 %v55, %v55
    %v72 = vpack.c.bf16 %v56, %v56
    %v73 = vpack.c.bf16 %v57, %v57
    %v74 = vld [vmem:[#allocation2] sm:$0xf]
    %v75 = vld [vmem:[#allocation2 + $0x4] sm:$0xf]
    %v76 = vld [vmem:[#allocation2 + $0x8] sm:$0xf]
    %v77 = vld [vmem:[#allocation2 + $0xc] sm:$0xf]
    %v78 = vld [vmem:[#allocation2 + $0x10] sm:$0xf]
    %v79 = vld [vmem:[#allocation2 + $0x14] sm:$0xf]
    %v80 = vld [vmem:[#allocation2 + $0x18] sm:$0xf]
    %v81 = vld [vmem:[#allocation2 + $0x1c] sm:$0xf]
    %v82 = vld [vmem:[#allocation2 + $0x20] sm:$0xf]
    %v83 = vld [vmem:[#allocation2 + $0x24] sm:$0xf]
    %v84 = vld [vmem:[#allocation2 + $0x28] sm:$0xf]
    %v85 = vld [vmem:[#allocation2 + $0x2c] sm:$0xf]
    %v86 = vld [vmem:[#allocation2 + $0x30] sm:$0xf]
    %v87 = vld [vmem:[#allocation2 + $0x34] sm:$0xf]
    %v88 = vld [vmem:[#allocation2 + $0x38] sm:$0xf]
    %v89 = vld [vmem:[#allocation2 + $0x3c] sm:$0xf]
    %v90 = vld [vmem:[#allocation2 + $0x40] sm:$0xf]
    %v91 = vld [vmem:[#allocation2 + $0x44] sm:$0xf]
    %v92 = vld [vmem:[#allocation2 + $0x48] sm:$0xf]
    %v93 = vld [vmem:[#allocation2 + $0x4c] sm:$0xf]
    %v94 = vld [vmem:[#allocation2 + $0x50] sm:$0xf]
    %v95 = vld [vmem:[#allocation2 + $0x54] sm:$0xf]
    %v96 = vld [vmem:[#allocation2 + $0x58] sm:$0xf]
    %v97 = vld [vmem:[#allocation2 + $0x5c] sm:$0xf]
    %v98 = vld [vmem:[#allocation2 + $0x60] sm:$0xf]
    %v99 = vld [vmem:[#allocation2 + $0x64] sm:$0xf]
    %v100 = vld [vmem:[#allocation2 + $0x68] sm:$0xf]
    %v101 = vld [vmem:[#allocation2 + $0x6c] sm:$0xf]
    %v102 = vld [vmem:[#allocation2 + $0x70] sm:$0xf]
    %v103 = vld [vmem:[#allocation2 + $0x74] sm:$0xf]
    %v104 = vld [vmem:[#allocation2 + $0x78] sm:$0xf]
    %v105 = vld [vmem:[#allocation2 + $0x7c] sm:$0xf]
    %v106 = vld [vmem:[#allocation2 + $0x80] sm:$0xf]
    %v107 = vld [vmem:[#allocation2 + $0x84] sm:$0xf]
    %v108 = vld [vmem:[#allocation2 + $0x88] sm:$0xf]
    %v109 = vld [vmem:[#allocation2 + $0x8c] sm:$0xf]
    %v110 = vld [vmem:[#allocation2 + $0x90] sm:$0xf]
    %v111 = vld [vmem:[#allocation2 + $0x94] sm:$0xf]
    %v112 = vld [vmem:[#allocation2 + $0x98] sm:$0xf]
    %v113 = vld [vmem:[#allocation2 + $0x9c] sm:$0xf]
    %v114 = vld [vmem:[#allocation2 + $0xa0] sm:$0xf]
    %v115 = vld [vmem:[#allocation2 + $0xa4] sm:$0xf]
    %v116 = vld [vmem:[#allocation2 + $0xa8] sm:$0xf]
    %v117 = vld [vmem:[#allocation2 + $0xac] sm:$0xf]
    %v118 = vld [vmem:[#allocation2 + $0xb0] sm:$0xf]
    %v119 = vld [vmem:[#allocation2 + $0xb4] sm:$0xf]
    %v120 = vld [vmem:[#allocation2 + $0xb8] sm:$0xf]
    %v121 = vld [vmem:[#allocation2 + $0xbc] sm:$0xf]
    %v122 = vld [vmem:[#allocation2 + $0xc0] sm:$0xf]
    %v123 = vld [vmem:[#allocation2 + $0xc4] sm:$0xf]
    %v124 = vld [vmem:[#allocation2 + $0xc8] sm:$0xf]
    %v125 = vld [vmem:[#allocation2 + $0xcc] sm:$0xf]
    %v126 = vld [vmem:[#allocation2 + $0xd0] sm:$0xf]
    %v127 = vld [vmem:[#allocation2 + $0xd4] sm:$0xf]
    %v128 = vld [vmem:[#allocation2 + $0xd8] sm:$0xf]
    %v129 = vld [vmem:[#allocation2 + $0xdc] sm:$0xf]
    %v130 = vld [vmem:[#allocation2 + $0xe0] sm:$0xf]
    %v131 = vld [vmem:[#allocation2 + $0xe4] sm:$0xf]
    %v132 = vld [vmem:[#allocation2 + $0xe8] sm:$0xf]
    %v133 = vld [vmem:[#allocation2 + $0xec] sm:$0xf]
    %v134 = vld [vmem:[#allocation2 + $0xf0] sm:$0xf]
    %v135 = vld [vmem:[#allocation2 + $0xf4] sm:$0xf]
    %v136 = vld [vmem:[#allocation2 + $0xf8] sm:$0xf]
    %v137 = vld [vmem:[#allocation2 + $0xfc] sm:$0xf]
    %v138 = vld [vmem:[#allocation2 + $0x100] sm:$0xf]
    %v139 = vld [vmem:[#allocation2 + $0x104] sm:$0xf]
    %v140 = vld [vmem:[#allocation2 + $0x108] sm:$0xf]
    %v141 = vld [vmem:[#allocation2 + $0x10c] sm:$0xf]
    %v142 = vld [vmem:[#allocation2 + $0x110] sm:$0xf]
    %v143 = vld [vmem:[#allocation2 + $0x114] sm:$0xf]
    %v144 = vld [vmem:[#allocation2 + $0x118] sm:$0xf]
    %v145 = vld [vmem:[#allocation2 + $0x11c] sm:$0xf]
    %v146 = vld [vmem:[#allocation2 + $0x120] sm:$0xf]
    %v147 = vld [vmem:[#allocation2 + $0x124] sm:$0xf]
    %v148 = vld [vmem:[#allocation2 + $0x128] sm:$0xf]
    %v149 = vld [vmem:[#allocation2 + $0x12c] sm:$0xf]
    %v150 = vld [vmem:[#allocation2 + $0x130] sm:$0xf]
    %v151 = vld [vmem:[#allocation2 + $0x134] sm:$0xf]
    %v152 = vld [vmem:[#allocation2 + $0x138] sm:$0xf]
    %v153 = vld [vmem:[#allocation2 + $0x13c] sm:$0xf]
    %v154 = vld [vmem:[#allocation2 + $0x140] sm:$0xf]
    %v155 = vld [vmem:[#allocation2 + $0x144] sm:$0xf]
    %v156 = vld [vmem:[#allocation2 + $0x148] sm:$0xf]
    %v157 = vld [vmem:[#allocation2 + $0x14c] sm:$0xf]
    %v158 = vld [vmem:[#allocation2 + $0x150] sm:$0xf]
    %v159 = vld [vmem:[#allocation2 + $0x154] sm:$0xf]
    %v160 = vld [vmem:[#allocation2 + $0x158] sm:$0xf]
    %v161 = vld [vmem:[#allocation2 + $0x15c] sm:$0xf]
    %v162 = vld [vmem:[#allocation2 + $0x160] sm:$0xf]
    %v163 = vld [vmem:[#allocation2 + $0x164] sm:$0xf]
    %v164 = vld [vmem:[#allocation2 + $0x168] sm:$0xf]
    %v165 = vld [vmem:[#allocation2 + $0x16c] sm:$0xf]
    %v166 = vld [vmem:[#allocation2 + $0x170] sm:$0xf]
    %v167 = vld [vmem:[#allocation2 + $0x174] sm:$0xf]
    %v168 = vld [vmem:[#allocation2 + $0x178] sm:$0xf]
    %v169 = vld [vmem:[#allocation2 + $0x17c] sm:$0xf]
    %v170 = vld [vmem:[#allocation2 + $0x180] sm:$0xf]
    %v171 = vld [vmem:[#allocation2 + $0x184] sm:$0xf]
    %v172 = vld [vmem:[#allocation2 + $0x188] sm:$0xf]
    %v173 = vld [vmem:[#allocation2 + $0x18c] sm:$0xf]
    %v174 = vld [vmem:[#allocation2 + $0x190] sm:$0xf]
    %v175 = vld [vmem:[#allocation2 + $0x194] sm:$0xf]
    %v176 = vld [vmem:[#allocation2 + $0x198] sm:$0xf]
    %v177 = vld [vmem:[#allocation2 + $0x19c] sm:$0xf]
    %v178 = vld [vmem:[#allocation2 + $0x1a0] sm:$0xf]
    %v179 = vld [vmem:[#allocation2 + $0x1a4] sm:$0xf]
    %v180 = vld [vmem:[#allocation2 + $0x1a8] sm:$0xf]
    %v181 = vld [vmem:[#allocation2 + $0x1ac] sm:$0xf]
    %v182 = vld [vmem:[#allocation2 + $0x1b0] sm:$0xf]
    %v183 = vld [vmem:[#allocation2 + $0x1b4] sm:$0xf]
    %v184 = vld [vmem:[#allocation2 + $0x1b8] sm:$0xf]
    %v185 = vld [vmem:[#allocation2 + $0x1bc] sm:$0xf]
    %v186 = vld [vmem:[#allocation2 + $0x1c0] sm:$0xf]
    %v187 = vld [vmem:[#allocation2 + $0x1c4] sm:$0xf]
    %v188 = vld [vmem:[#allocation2 + $0x1c8] sm:$0xf]
    %v189 = vld [vmem:[#allocation2 + $0x1cc] sm:$0xf]
    %v190 = vld [vmem:[#allocation2 + $0x1d0] sm:$0xf]
    %v191 = vld [vmem:[#allocation2 + $0x1d4] sm:$0xf]
    %v192 = vld [vmem:[#allocation2 + $0x1d8] sm:$0xf]
    %v193 = vld [vmem:[#allocation2 + $0x1dc] sm:$0xf]
    %v194 = vld [vmem:[#allocation2 + $0x1e0] sm:$0xf]
    %v195 = vld [vmem:[#allocation2 + $0x1e4] sm:$0xf]
    %v196 = vld [vmem:[#allocation2 + $0x1e8] sm:$0xf]
    %v197 = vld [vmem:[#allocation2 + $0x1ec] sm:$0xf]
    %v198 = vld [vmem:[#allocation2 + $0x1f0] sm:$0xf]
    %v199 = vld [vmem:[#allocation2 + $0x1f4] sm:$0xf]
    %v200 = vld [vmem:[#allocation2 + $0x1f8] sm:$0xf]
    %v201 = vld [vmem:[#allocation2 + $0x1fc] sm:$0xf]
    %v202 = vld [vmem:[%s2] sm:$0x1]
    %v204 = vperm.slane %v202, 0
    %v334 = vunpack.c.l.b16 %v74
    %v335 = vunpack.c.l.b16 %v75
    %v336 = vunpack.c.l.b16 %v76
    %v337 = vunpack.c.l.b16 %v77
    %v338 = vunpack.c.l.b16 %v78
    %v339 = vunpack.c.l.b16 %v79
    %v340 = vunpack.c.l.b16 %v80
    %v341 = vunpack.c.l.b16 %v81
    %v342 = vunpack.c.l.b16 %v82
    %v343 = vunpack.c.l.b16 %v83
    %v344 = vunpack.c.l.b16 %v84
    %v345 = vunpack.c.l.b16 %v85
    %v346 = vunpack.c.l.b16 %v86
    %v347 = vunpack.c.l.b16 %v87
    %v348 = vunpack.c.l.b16 %v88
    %v349 = vunpack.c.l.b16 %v89
    %v350 = vunpack.c.l.b16 %v90
    %v351 = vunpack.c.l.b16 %v91
    %v352 = vunpack.c.l.b16 %v92
    %v353 = vunpack.c.l.b16 %v93
    %v354 = vunpack.c.l.b16 %v94
    %v355 = vunpack.c.l.b16 %v95
    %v356 = vunpack.c.l.b16 %v96
    %v357 = vunpack.c.l.b16 %v97
    %v358 = vunpack.c.l.b16 %v98
    %v359 = vunpack.c.l.b16 %v99
    %v360 = vunpack.c.l.b16 %v100
    %v361 = vunpack.c.l.b16 %v101
    %v362 = vunpack.c.l.b16 %v102
    %v363 = vunpack.c.l.b16 %v103
    %v364 = vunpack.c.l.b16 %v104
    %v365 = vunpack.c.l.b16 %v105
    %v366 = vunpack.c.l.b16 %v106
    %v367 = vunpack.c.l.b16 %v107
    %v368 = vunpack.c.l.b16 %v108
    %v369 = vunpack.c.l.b16 %v109
    %v370 = vunpack.c.l.b16 %v110
    %v371 = vunpack.c.l.b16 %v111
    %v372 = vunpack.c.l.b16 %v112
    %v373 = vunpack.c.l.b16 %v113
    %v374 = vunpack.c.l.b16 %v114
    %v375 = vunpack.c.l.b16 %v115
    %v376 = vunpack.c.l.b16 %v116
    %v377 = vunpack.c.l.b16 %v117
    %v378 = vunpack.c.l.b16 %v118
    %v379 = vunpack.c.l.b16 %v119
    %v380 = vunpack.c.l.b16 %v120
    %v381 = vunpack.c.l.b16 %v121
    %v382 = vunpack.c.l.b16 %v122
    %v383 = vunpack.c.l.b16 %v123
    %v384 = vunpack.c.l.b16 %v124
    %v385 = vunpack.c.l.b16 %v125
    %v386 = vunpack.c.l.b16 %v126
    %v387 = vunpack.c.l.b16 %v127
    %v388 = vunpack.c.l.b16 %v128
    %v389 = vunpack.c.l.b16 %v129
    %v390 = vunpack.c.l.b16 %v130
    %v391 = vunpack.c.l.b16 %v131
    %v392 = vunpack.c.l.b16 %v132
    %v393 = vunpack.c.l.b16 %v133
    %v394 = vunpack.c.l.b16 %v134
    %v395 = vunpack.c.l.b16 %v135
    %v396 = vunpack.c.l.b16 %v136
    %v397 = vunpack.c.l.b16 %v137
    %v398 = vunpack.c.l.b16 %v138
    %v399 = vunpack.c.l.b16 %v139
    %v400 = vunpack.c.l.b16 %v140
    %v401 = vunpack.c.l.b16 %v141
    %v402 = vunpack.c.l.b16 %v142
    %v403 = vunpack.c.l.b16 %v143
    %v404 = vunpack.c.l.b16 %v144
    %v405 = vunpack.c.l.b16 %v145
    %v406 = vunpack.c.l.b16 %v146
    %v407 = vunpack.c.l.b16 %v147
    %v408 = vunpack.c.l.b16 %v148
    %v409 = vunpack.c.l.b16 %v149
    %v410 = vunpack.c.l.b16 %v150
    %v411 = vunpack.c.l.b16 %v151
    %v412 = vunpack.c.l.b16 %v152
    %v413 = vunpack.c.l.b16 %v153
    %v414 = vunpack.c.l.b16 %v154
    %v415 = vunpack.c.l.b16 %v155
    %v416 = vunpack.c.l.b16 %v156
    %v417 = vunpack.c.l.b16 %v157
    %v418 = vunpack.c.l.b16 %v158
    %v419 = vunpack.c.l.b16 %v159
    %v420 = vunpack.c.l.b16 %v160
    %v421 = vunpack.c.l.b16 %v161
    %v422 = vunpack.c.l.b16 %v162
    %v423 = vunpack.c.l.b16 %v163
    %v424 = vunpack.c.l.b16 %v164
    %v425 = vunpack.c.l.b16 %v165
    %v426 = vunpack.c.l.b16 %v166
    %v427 = vunpack.c.l.b16 %v167
    %v428 = vunpack.c.l.b16 %v168
    %v429 = vunpack.c.l.b16 %v169
    %v430 = vunpack.c.l.b16 %v170
    %v431 = vunpack.c.l.b16 %v171
    %v432 = vunpack.c.l.b16 %v172
    %v433 = vunpack.c.l.b16 %v173
    %v434 = vunpack.c.l.b16 %v174
    %v435 = vunpack.c.l.b16 %v175
    %v436 = vunpack.c.l.b16 %v176
    %v437 = vunpack.c.l.b16 %v177
    %v438 = vunpack.c.l.b16 %v178
    %v439 = vunpack.c.l.b16 %v179
    %v440 = vunpack.c.l.b16 %v180
    %v441 = vunpack.c.l.b16 %v181
    %v442 = vunpack.c.l.b16 %v182
    %v443 = vunpack.c.l.b16 %v183
    %v444 = vunpack.c.l.b16 %v184
    %v445 = vunpack.c.l.b16 %v185
    %v446 = vunpack.c.l.b16 %v186
    %v447 = vunpack.c.l.b16 %v187
    %v448 = vunpack.c.l.b16 %v188
    %v449 = vunpack.c.l.b16 %v189
    %v450 = vunpack.c.l.b16 %v190
    %v451 = vunpack.c.l.b16 %v191
    %v452 = vunpack.c.l.b16 %v192
    %v453 = vunpack.c.l.b16 %v193
    %v454 = vunpack.c.l.b16 %v194
    %v455 = vunpack.c.l.b16 %v195
    %v456 = vunpack.c.l.b16 %v196
    %v457 = vunpack.c.l.b16 %v197
    %v458 = vunpack.c.l.b16 %v198
    %v459 = vunpack.c.l.b16 %v199
    %v460 = vunpack.c.l.b16 %v200
    %v461 = vunpack.c.l.b16 %v201
    %v462 = vpack.c.b16 %v335, %v334
    %v463 = vpack.c.b16 %v337, %v336
    %v464 = vpack.c.b16 %v339, %v338
    %v465 = vpack.c.b16 %v341, %v340
    %v466 = vpack.c.b16 %v343, %v342
    %v467 = vpack.c.b16 %v345, %v344
    %v468 = vpack.c.b16 %v347, %v346
    %v469 = vpack.c.b16 %v349, %v348
    %v470 = vpack.c.b16 %v351, %v350
    %v471 = vpack.c.b16 %v353, %v352
    %v472 = vpack.c.b16 %v355, %v354
    %v473 = vpack.c.b16 %v357, %v356
    %v474 = vpack.c.b16 %v359, %v358
    %v475 = vpack.c.b16 %v361, %v360
    %v476 = vpack.c.b16 %v363, %v362
    %v477 = vpack.c.b16 %v365, %v364
    %v478 = vpack.c.b16 %v367, %v366
    %v479 = vpack.c.b16 %v369, %v368
    %v480 = vpack.c.b16 %v371, %v370
    %v481 = vpack.c.b16 %v373, %v372
    %v482 = vpack.c.b16 %v375, %v374
    %v483 = vpack.c.b16 %v377, %v376
    %v484 = vpack.c.b16 %v379, %v378
    %v485 = vpack.c.b16 %v381, %v380
    %v486 = vpack.c.b16 %v383, %v382
    %v487 = vpack.c.b16 %v385, %v384
    %v488 = vpack.c.b16 %v387, %v386
    %v489 = vpack.c.b16 %v389, %v388
    %v490 = vpack.c.b16 %v391, %v390
    %v491 = vpack.c.b16 %v393, %v392
    %v492 = vpack.c.b16 %v395, %v394
    %v493 = vpack.c.b16 %v397, %v396
    %v494 = vpack.c.b16 %v399, %v398
    %v495 = vpack.c.b16 %v401, %v400
    %v496 = vpack.c.b16 %v403, %v402
    %v497 = vpack.c.b16 %v405, %v404
    %v498 = vpack.c.b16 %v407, %v406
    %v499 = vpack.c.b16 %v409, %v408
    %v500 = vpack.c.b16 %v411, %v410
    %v501 = vpack.c.b16 %v413, %v412
    %v502 = vpack.c.b16 %v415, %v414
    %v503 = vpack.c.b16 %v417, %v416
    %v504 = vpack.c.b16 %v419, %v418
    %v505 = vpack.c.b16 %v421, %v420
    %v506 = vpack.c.b16 %v423, %v422
    %v507 = vpack.c.b16 %v425, %v424
    %v508 = vpack.c.b16 %v427, %v426
    %v509 = vpack.c.b16 %v429, %v428
    %v510 = vpack.c.b16 %v431, %v430
    %v511 = vpack.c.b16 %v433, %v432
    %v512 = vpack.c.b16 %v435, %v434
    %v513 = vpack.c.b16 %v437, %v436
    %v514 = vpack.c.b16 %v439, %v438
    %v515 = vpack.c.b16 %v441, %v440
    %v516 = vpack.c.b16 %v443, %v442
    %v517 = vpack.c.b16 %v445, %v444
    %v518 = vpack.c.b16 %v447, %v446
    %v519 = vpack.c.b16 %v449, %v448
    %v520 = vpack.c.b16 %v451, %v450
    %v521 = vpack.c.b16 %v453, %v452
    %v522 = vpack.c.b16 %v455, %v454
    %v523 = vpack.c.b16 %v457, %v456
    %v524 = vpack.c.b16 %v459, %v458
    %v525 = vpack.c.b16 %v461, %v460
    %590 = vmatpush.bf16.msra.mxu0 %v469
    %591 = vmatpush.bf16.msra.mxu0 %v468
    %592 = vmatpush.bf16.msra.mxu0 %v467
    %593 = vmatpush.bf16.msra.mxu0 %v466
    %594 = vmatpush.bf16.msra.mxu0 %v465
    %595 = vmatpush.bf16.msra.mxu0 %v464
    %596 = vmatpush.bf16.msra.mxu0 %v463
    %597 = vmatpush.bf16.msra.mxu0 %v462
    %598 = vmatmul.bf16.gmra.mxu0 %v66
    %v599 = vpop.f32.mrf.mxu0
    %v600 = vadd.f32 %v204, %v599
    %v601 = vpop.f32.mrf.mxu0
    %602 = vdwg.mxu0
    %603 = vmatpush.bf16.msra.mxu0 %v477
    %604 = vmatpush.bf16.msra.mxu0 %v476
    %605 = vmatpush.bf16.msra.mxu0 %v475
    %606 = vmatpush.bf16.msra.mxu0 %v474
    %607 = vmatpush.bf16.msra.mxu0 %v473
    %608 = vmatpush.bf16.msra.mxu0 %v472
    %609 = vmatpush.bf16.msra.mxu0 %v471
    %610 = vmatpush.bf16.msra.mxu0 %v470
    %611 = vmatmul.bf16.gmra.mxu0 %v67
    %v612 = vpop.f32.mrf.mxu0
    %v613 = vadd.f32 %v600, %v612
    %v614 = vpop.f32.mrf.mxu0
    %615 = vdwg.mxu0
    %616 = vmatpush.bf16.msra.mxu0 %v485
    %617 = vmatpush.bf16.msra.mxu0 %v484
    %618 = vmatpush.bf16.msra.mxu0 %v483
    %619 = vmatpush.bf16.msra.mxu0 %v482
    %620 = vmatpush.bf16.msra.mxu0 %v481
    %621 = vmatpush.bf16.msra.mxu0 %v480
    %622 = vmatpush.bf16.msra.mxu0 %v479
    %623 = vmatpush.bf16.msra.mxu0 %v478
    %624 = vmatmul.bf16.gmra.mxu0 %v68
    %v625 = vpop.f32.mrf.mxu0
    %v626 = vadd.f32 %v613, %v625
    %v627 = vpop.f32.mrf.mxu0
    %628 = vdwg.mxu0
    %629 = vmatpush.bf16.msra.mxu0 %v493
    %630 = vmatpush.bf16.msra.mxu0 %v492
    %631 = vmatpush.bf16.msra.mxu0 %v491
    %632 = vmatpush.bf16.msra.mxu0 %v490
    %633 = vmatpush.bf16.msra.mxu0 %v489
    %634 = vmatpush.bf16.msra.mxu0 %v488
    %635 = vmatpush.bf16.msra.mxu0 %v487
    %636 = vmatpush.bf16.msra.mxu0 %v486
    %637 = vmatmul.bf16.gmra.mxu0 %v69
    %v638 = vpop.f32.mrf.mxu0
    %v639 = vadd.f32 %v626, %v638
    %v640 = vpop.f32.mrf.mxu0
    %641 = vdwg.mxu0
    %642 = vmatpush.bf16.msra.mxu0 %v501
    %643 = vmatpush.bf16.msra.mxu0 %v500
    %644 = vmatpush.bf16.msra.mxu0 %v499
    %645 = vmatpush.bf16.msra.mxu0 %v498
    %646 = vmatpush.bf16.msra.mxu0 %v497
    %647 = vmatpush.bf16.msra.mxu0 %v496
    %648 = vmatpush.bf16.msra.mxu0 %v495
    %649 = vmatpush.bf16.msra.mxu0 %v494
    %650 = vmatmul.bf16.gmra.mxu0 %v70
    %v651 = vpop.f32.mrf.mxu0
    %v652 = vadd.f32 %v639, %v651
    %v653 = vpop.f32.mrf.mxu0
    %654 = vdwg.mxu0
    %655 = vmatpush.bf16.msra.mxu0 %v509
    %656 = vmatpush.bf16.msra.mxu0 %v508
    %657 = vmatpush.bf16.msra.mxu0 %v507
    %658 = vmatpush.bf16.msra.mxu0 %v506
    %659 = vmatpush.bf16.msra.mxu0 %v505
    %660 = vmatpush.bf16.msra.mxu0 %v504
    %661 = vmatpush.bf16.msra.mxu0 %v503
    %662 = vmatpush.bf16.msra.mxu0 %v502
    %663 = vmatmul.bf16.gmra.mxu0 %v71
    %v664 = vpop.f32.mrf.mxu0
    %v665 = vadd.f32 %v652, %v664
    %v666 = vpop.f32.mrf.mxu0
    %667 = vdwg.mxu0
    %668 = vmatpush.bf16.msra.mxu0 %v517
    %669 = vmatpush.bf16.msra.mxu0 %v516
    %670 = vmatpush.bf16.msra.mxu0 %v515
    %671 = vmatpush.bf16.msra.mxu0 %v514
    %672 = vmatpush.bf16.msra.mxu0 %v513
    %673 = vmatpush.bf16.msra.mxu0 %v512
    %674 = vmatpush.bf16.msra.mxu0 %v511
    %675 = vmatpush.bf16.msra.mxu0 %v510
    %676 = vmatmul.bf16.gmra.mxu0 %v72
    %v677 = vpop.f32.mrf.mxu0
    %v678 = vadd.f32 %v665, %v677
    %v679 = vpop.f32.mrf.mxu0
    %680 = vdwg.mxu0
    %681 = vmatpush.bf16.msra.mxu0 %v525
    %682 = vmatpush.bf16.msra.mxu0 %v524
    %683 = vmatpush.bf16.msra.mxu0 %v523
    %684 = vmatpush.bf16.msra.mxu0 %v522
    %685 = vmatpush.bf16.msra.mxu0 %v521
    %686 = vmatpush.bf16.msra.mxu0 %v520
    %687 = vmatpush.bf16.msra.mxu0 %v519
    %688 = vmatpush.bf16.msra.mxu0 %v518
    %689 = vmatmul.bf16.gmra.mxu0 %v73
    %v690 = vpop.f32.mrf.mxu0
    %v691 = vadd.f32 %v678, %v690
    %v692 = vpop.f32.mrf.mxu0
    %693 = vdwg.mxu0
    %vm694 = vcmp.gt.f32.partialorder %v691, 0.0
    %v695 = vmul.f32 %v691, 0.2
    %v696 = vsel %vm694, %v691, %v695
    %v697 = vpack.c.bf16 %v696, %v696
    %v698 = vld [vmem:[%s3] sm:$0xf]
    %v699 = vld [vmem:[%s3 + $0x4] sm:$0xf]
    %v700 = vld [vmem:[%s3 + $0x8] sm:$0xf]
    %v701 = vld [vmem:[%s3 + $0xc] sm:$0xf]
    %v702 = vld [vmem:[%s3 + $0x10] sm:$0xf]
    %v703 = vld [vmem:[%s3 + $0x14] sm:$0xf]
    %v704 = vld [vmem:[%s3 + $0x18] sm:$0xf]
    %v705 = vld [vmem:[%s3 + $0x1c] sm:$0xf]
    %v706 = vld [vmem:[%s3 + $0x20] sm:$0xf]
    %v707 = vld [vmem:[%s3 + $0x24] sm:$0xf]
    %v708 = vld [vmem:[%s3 + $0x28] sm:$0xf]
    %v709 = vld [vmem:[%s3 + $0x2c] sm:$0xf]
    %v710 = vld [vmem:[%s3 + $0x30] sm:$0xf]
    %v711 = vld [vmem:[%s3 + $0x34] sm:$0xf]
    %v712 = vld [vmem:[%s3 + $0x38] sm:$0xf]
    %v713 = vld [vmem:[%s3 + $0x3c] sm:$0xf]
    %v714 = vld [vmem:[%s4] sm:$0x1]
    %v716 = vperm.slane %v714, 0
    %v734 = vunpack.c.l.b16 %v698
    %v735 = vunpack.c.l.b16 %v699
    %v736 = vunpack.c.l.b16 %v700
    %v737 = vunpack.c.l.b16 %v701
    %v738 = vunpack.c.l.b16 %v702
    %v739 = vunpack.c.l.b16 %v703
    %v740 = vunpack.c.l.b16 %v704
    %v741 = vunpack.c.l.b16 %v705
    %v742 = vunpack.c.l.b16 %v706
    %v743 = vunpack.c.l.b16 %v707
    %v744 = vunpack.c.l.b16 %v708
    %v745 = vunpack.c.l.b16 %v709
    %v746 = vunpack.c.l.b16 %v710
    %v747 = vunpack.c.l.b16 %v711
    %v748 = vunpack.c.l.b16 %v712
    %v749 = vunpack.c.l.b16 %v713
    %v750 = vpack.c.b16 %v735, %v734
    %v751 = vpack.c.b16 %v737, %v736
    %v752 = vpack.c.b16 %v739, %v738
    %v753 = vpack.c.b16 %v741, %v740
    %v754 = vpack.c.b16 %v743, %v742
    %v755 = vpack.c.b16 %v745, %v744
    %v756 = vpack.c.b16 %v747, %v746
    %v757 = vpack.c.b16 %v749, %v748
    %766 = vmatpush.bf16.msra.mxu0 %v757
    %767 = vmatpush.bf16.msra.mxu0 %v756
    %768 = vmatpush.bf16.msra.mxu0 %v755
    %769 = vmatpush.bf16.msra.mxu0 %v754
    %770 = vmatpush.bf16.msra.mxu0 %v753
    %771 = vmatpush.bf16.msra.mxu0 %v752
    %772 = vmatpush.bf16.msra.mxu0 %v751
    %773 = vmatpush.bf16.msra.mxu0 %v750
    %774 = vmatmul.bf16.gmra.mxu0 %v697
    %v775 = vpop.f32.mrf.mxu0
    %v776 = vadd.f32 %v716, %v775
    %v777 = vpop.f32.mrf.mxu0
    %778 = vdwg.mxu0
    %vm779 = vcmask 1041408
    %v780 = vsel %vm779, %v776, 0.0
    %v781 = vrot.slane %v780, 4
    %v782 = vadd.f32 %v780, %v781
    %v783 = vrot.slane %v782, 2
    %v784 = vadd.f32 %v782, %v783
    %v785 = vrot.slane %v784, 1
    %v786 = vadd.f32 %v784, %v785
    %v787 = vrcp.pop 2.0
    %v788 = vmul.f32 2.0, %v787
    %v789 = vsub.f32 1.0, %v788
    %v790 = vmul.f32 %v787, %v789
    %v791 = vadd.f32 %v787, %v790
    %vm792 = vweird.f32 %v787
    %v793 = vsel %vm792, %v787, %v791
    %v794 = vmul.f32 %v786, %v793
    %v795 = vsub.f32 %v776, %v794
    %v796 = vmul.f32 %v795, %v795
    %v797 = vsel %vm779, %v796, 0.0
    %v798 = vrot.slane %v797, 4
    %v799 = vadd.f32 %v797, %v798
    %v800 = vrot.slane %v799, 2
    %v801 = vadd.f32 %v799, %v800
    %v802 = vrot.slane %v801, 1
    %v803 = vadd.f32 %v801, %v802
    %v804 = vmul.f32 %v803, %v793
    %v805 = vadd.f32 %v804, 1e-05
    %v806 = vrsqrt.pop %v805
    %v807 = vmul.f32 %v806, %v805
    %v808 = vmul.f32 %v807, %v806
    %v809 = vmul.f32 0.5, %v808
    %v810 = vsub.f32 1.5, %v809
    %v811 = vmul.f32 %v806, %v810
    %vm812 = vweird.f32 %v805
    %vm813 = vweird.f32 %v806
    %vm814 = vmor %vm812, %vm813
    %v815 = vsel %vm814, %v806, %v811
    %v816 = vmul.f32 %v795, %v815
    %vm817 = vcmp.gt.f32.partialorder %v816, 0.0
    %v818 = vmul.f32 %v816, 0.2
    %v819 = vsel %vm817, %v816, %v818
    %v820 = vpack.c.bf16 %v819, %v819
    %v821 = vld [vmem:[%s5] sm:$0xf]
    %v822 = vld [vmem:[%s5 + $0x4] sm:$0xf]
    %v823 = vld [vmem:[%s5 + $0x8] sm:$0xf]
    %v824 = vld [vmem:[%s5 + $0xc] sm:$0xf]
    %v825 = vld [vmem:[%s5 + $0x10] sm:$0xf]
    %v826 = vld [vmem:[%s5 + $0x14] sm:$0xf]
    %v827 = vld [vmem:[%s5 + $0x18] sm:$0xf]
    %v828 = vld [vmem:[%s5 + $0x1c] sm:$0xf]
    %v829 = vld [vmem:[%s5 + $0x20] sm:$0xf]
    %v830 = vld [vmem:[%s5 + $0x24] sm:$0xf]
    %v831 = vld [vmem:[%s5 + $0x28] sm:$0xf]
    %v832 = vld [vmem:[%s5 + $0x2c] sm:$0xf]
    %v833 = vld [vmem:[%s5 + $0x30] sm:$0xf]
    %v834 = vld [vmem:[%s5 + $0x34] sm:$0xf]
    %v835 = vld [vmem:[%s5 + $0x38] sm:$0xf]
    %v836 = vld [vmem:[%s5 + $0x3c] sm:$0xf]
    %v837 = vld [vmem:[%s6] sm:$0x1]
    %v839 = vperm.slane %v837, 0
    %v857 = vunpack.c.l.b16 %v821
    %v858 = vunpack.c.l.b16 %v822
    %v859 = vunpack.c.l.b16 %v823
    %v860 = vunpack.c.l.b16 %v824
    %v861 = vunpack.c.l.b16 %v825
    %v862 = vunpack.c.l.b16 %v826
    %v863 = vunpack.c.l.b16 %v827
    %v864 = vunpack.c.l.b16 %v828
    %v865 = vunpack.c.l.b16 %v829
    %v866 = vunpack.c.l.b16 %v830
    %v867 = vunpack.c.l.b16 %v831
    %v868 = vunpack.c.l.b16 %v832
    %v869 = vunpack.c.l.b16 %v833
    %v870 = vunpack.c.l.b16 %v834
    %v871 = vunpack.c.l.b16 %v835
    %v872 = vunpack.c.l.b16 %v836
    %v873 = vpack.c.b16 %v858, %v857
    %v874 = vpack.c.b16 %v860, %v859
    %v875 = vpack.c.b16 %v862, %v861
    %v876 = vpack.c.b16 %v864, %v863
    %v877 = vpack.c.b16 %v866, %v865
    %v878 = vpack.c.b16 %v868, %v867
    %v879 = vpack.c.b16 %v870, %v869
    %v880 = vpack.c.b16 %v872, %v871
    %889 = vmatpush.bf16.msra.mxu0 %v880
    %890 = vmatpush.bf16.msra.mxu0 %v879
    %891 = vmatpush.bf16.msra.mxu0 %v878
    %892 = vmatpush.bf16.msra.mxu0 %v877
    %893 = vmatpush.bf16.msra.mxu0 %v876
    %894 = vmatpush.bf16.msra.mxu0 %v875
    %895 = vmatpush.bf16.msra.mxu0 %v874
    %896 = vmatpush.bf16.msra.mxu0 %v873
    %897 = vmatmul.bf16.gmra.mxu0 %v820
    %v898 = vpop.f32.mrf.mxu0
    %v899 = vadd.f32 %v839, %v898
    %v900 = vpop.f32.mrf.mxu0
    %901 = vdwg.mxu0
    %902 = vst [vmem:[#allocation5] sm:$0x3] %v899
    // Predicated region
    $region34: #{bi_gan_encoder.1} parent=1 // pred_check
      _
    $region35: #{bi_gan_encoder.1} parent=1 // pred_check_branch
      %904 = sbr.rel (0) target = $region37
    $region36: #{bi_gan_encoder.1} parent=1 // pred_region
      %906 = vsyncadd [#allocation4], 0
      %s908 = sshll.u32 [#allocation5], 4
      %s909 = int_to_ptr.vmem [resolvable:$true] %s908
      %s910 = sshll.u32 %s7, 4
      %s911 = int_to_ptr.hbm [resolvable:$true] %s910
      %913 = dma.vmem_to_hbm [thread:$0]  %s909, 32, %s911, [#allocation4]
    $region37: #{bi_gan_encoder.1} parent=1 // pred_fallthru
      _
    // Predicated region
    $region38: #{bi_gan_encoder.1} parent=1 // pred_check
      _
    $region39: #{bi_gan_encoder.1} parent=1 // pred_check_branch
      %915 = sbr.rel (0) target = $region41
    $region40: #{bi_gan_encoder.1} parent=1 // pred_region
      %917 = dma.done [#allocation4], 32
    $region41: #{bi_gan_encoder.1} parent=1 // pred_fallthru
      _
    %918 = vsyncpa [#allocation3], 1
    %919 = vsyncpa [#allocation4], 1

</llo_original>
